<compile_context>
chip_gen: v6e
topology: v6e:2x2x1
jax: 0.10.0
libtpu: 0.0.40
codegen_flags: <defaults>
</compile_context>

<pallas_src>
import functools
import math

import jax
import jax.numpy as jnp
from jax.experimental import pallas as pl
from jax.experimental.pallas import tpu as pltpu

_HALF_LOG_2PI = 0.5 * math.log(2.0 * math.pi)


def _diag_gaussian_kernel(x_ref, w_ref, b_ref, loc_ref, logstd_ref, scale_ref,
                          *, d_out):
    x = x_ref[...]
    # Fused linear: z = [mean | logstd], f32 accumulation on the MXU.
    z = jnp.dot(x, w_ref[...], preferred_element_type=jnp.float32) + b_ref[...]
    mean = z[:, :d_out]
    logstd = z[:, d_out:]
    # Three full-block stores (no masked partial stores into shared vregs).
    loc_ref[...] = mean.astype(loc_ref.dtype)
    logstd_ref[...] = logstd.astype(logstd_ref.dtype)
    scale_ref[...] = jnp.exp(logstd).astype(scale_ref.dtype)  # EUP exp


def _round_up(n, m):
    return ((n + m - 1) // m) * m


def build_diag_gaussian_params(w_mean, b_mean, w_logstd, b_logstd):
    """Fuse the two linear heads once, at parameter-build time.

    Args (torch fc_*.weight is (out, in); pass its transpose):
      w_mean, w_logstd: (D_in, D_out)
      b_mean, b_logstd: (1, D_out)
    Returns:
      (w_fused, b_fused): (D_in, 2*D_out), (1, 2*D_out)
    """
    w = jnp.concatenate([w_mean, w_logstd], axis=1)
    b = jnp.concatenate([b_mean, b_logstd], axis=1)
    return w, b


def diag_gaussian_head(x, w_fused, b_fused, *, block_b=8192):
    """Forward pass of DiagGaussianHead with pre-fused parameters.

    Args:
      x:       (B, D_in) activations.
      w_fused: (D_in, 2*D_out)  == [W_mean | W_logstd]
      b_fused: (1, 2*D_out)     == [b_mean | b_logstd]
    Returns:
      (loc, logstd, scale): loc in x.dtype, logstd/scale in f32, each (B, D_out).
      FixedNormal params are (loc, scale).
    """
    B, D_in = x.shape
    two_d_out = w_fused.shape[1]
    d_out = two_d_out // 2

    # Tile derivation: keep >= 2 (even) tiles so v7x megacore can shard the
    # batch axis; derive TB from B so pad waste stays < 8 rows per tile.
    num_tiles = max(2, pl.cdiv(B, block_b))
    if num_tiles % 2:
        num_tiles += 1
    TB = _round_up(pl.cdiv(B, num_tiles), 8)
    B_pad = num_tiles * TB
    x_in = jnp.pad(x, ((0, B_pad - B), (0, 0))) if B_pad != B else x

    itemsize = jnp.dtype(x.dtype).itemsize
    cost = pl.CostEstimate(
        flops=2 * B_pad * D_in * two_d_out,
        transcendentals=B_pad * d_out,
        bytes_accessed=(B_pad * D_in * itemsize                 # x
                        + D_in * two_d_out * 4 + two_d_out * 4  # fused W, b
                        + B_pad * d_out * (itemsize + 4 + 4)),  # loc,logstd,scale
    )

    loc, logstd, scale = pl.pallas_call(
        functools.partial(_diag_gaussian_kernel, d_out=d_out),
        out_shape=(
            jax.ShapeDtypeStruct((B_pad, d_out), x.dtype),       # loc
            jax.ShapeDtypeStruct((B_pad, d_out), jnp.float32),   # logstd (f32)
            jax.ShapeDtypeStruct((B_pad, d_out), jnp.float32),   # scale  (f32)
        ),
        grid=(num_tiles,),
        in_specs=[
            pl.BlockSpec((TB, D_in), lambda i: (i, 0)),             # x: batch-tiled
            pl.BlockSpec((D_in, two_d_out), lambda i: (0, 0)),      # fused W (replicated)
            pl.BlockSpec((1, two_d_out), lambda i: (0, 0)),         # fused b (replicated)
        ],
        out_specs=(
            pl.BlockSpec((TB, d_out), lambda i: (i, 0)),
            pl.BlockSpec((TB, d_out), lambda i: (i, 0)),
            pl.BlockSpec((TB, d_out), lambda i: (i, 0)),
        ),
        compiler_params=pltpu.CompilerParams(
            dimension_semantics=("parallel",),   # megacore sharding on v7x
        ),
        cost_estimate=cost,
    )(x_in, w_fused, b_fused)

    if B_pad != B:
        loc, logstd, scale = loc[:B], logstd[:B], scale[:B]
    return loc, logstd, scale


# --- FixedNormal helpers (pure JAX glue; use the kernel's logstd directly) ---
def fixed_normal_log_prob(loc, logstd, scale, actions):
    # Normal log_prob summed over action dims, keepdims -> (B, 1).
    lp = -((actions - loc) ** 2) / (2.0 * scale ** 2) - logstd - _HALF_LOG_2PI
    return lp.reshape(actions.shape[0], -1).sum(-1, keepdims=True)


def fixed_normal_entropy(logstd):
    return (0.5 + _HALF_LOG_2PI + logstd).sum(-1)


def fixed_normal_mode(loc):
    return loc


def orthogonal_init(key, rows, cols, gain=1.0, dtype=jnp.float32):
    # Same semantics as nn.init.orthogonal_.
    init = jax.nn.initializers.orthogonal(scale=gain)
    return init(key, (rows, cols), dtype)


if __name__ == "__main__":
    key = jax.random.PRNGKey(0)
    k_x, k_wm, k_ws = jax.random.split(key, 3)

    batch = 2
    num_inputs = 32
    num_outputs = 8

    x = jax.random.normal(k_x, (batch, num_inputs), dtype=jnp.float32)

    # torch Linear weight is (out, in); kernel wants (in, out).
    w_mean = orthogonal_init(k_wm, num_outputs, num_inputs).T       # (in, out)
    w_logstd = orthogonal_init(k_ws, num_outputs, num_inputs).T     # (in, out)
    b_mean = jnp.zeros((1, num_outputs), dtype=jnp.float32)
    b_logstd = jnp.zeros((1, num_outputs), dtype=jnp.float32)

    # Parameters are fused ONCE (at build time), not per forward call.
    w_fused, b_fused = build_diag_gaussian_params(w_mean, b_mean, w_logstd, b_logstd)

    loc, logstd, scale = diag_gaussian_head(x, w_fused, b_fused)
    loc = jax.block_until_ready(loc)
    logstd = jax.block_until_ready(logstd)
    scale = jax.block_until_ready(scale)

    # Reference check in plain JAX.
    ref_loc = x @ w_mean + b_mean
    ref_logstd = x @ w_logstd + b_logstd
    ref_scale = jnp.exp(ref_logstd)
    assert loc.shape == (batch, num_outputs)
    assert jnp.allclose(loc, ref_loc, atol=1e-5, rtol=1e-5)
    assert jnp.allclose(logstd, ref_logstd, atol=1e-5, rtol=1e-5)
    assert jnp.allclose(scale, ref_scale, atol=1e-5, rtol=1e-5)

    # Exercise the multi-tile / padded-batch path as well.
    big_b = 1027
    xb = jax.random.normal(jax.random.PRNGKey(2), (big_b, num_inputs), dtype=jnp.float32)
    loc_b, logstd_b, scale_b = diag_gaussian_head(xb, w_fused, b_fused)
    loc_b = jax.block_until_ready(loc_b)
    assert loc_b.shape == (big_b, num_outputs)
    assert jnp.allclose(loc_b, xb @ w_mean + b_mean, atol=1e-4, rtol=1e-4)
    assert jnp.allclose(scale_b, jnp.exp(xb @ w_logstd + b_logstd), atol=1e-4, rtol=1e-4)

    # Exercise a rollout-sized batch with multiple grid steps (block_b kicks in).
    huge_b = 20000
    xh = jax.random.normal(jax.random.PRNGKey(3), (huge_b, num_inputs), dtype=jnp.float32)
    loc_h, logstd_h, scale_h = diag_gaussian_head(xh, w_fused, b_fused)
    loc_h = jax.block_until_ready(loc_h)
    assert loc_h.shape == (huge_b, num_outputs)
    assert jnp.allclose(loc_h, xh @ w_mean + b_mean, atol=1e-4, rtol=1e-4)

    # FixedNormal methods (glue, uses kernel-provided logstd — no exp->log round trip).
    actions = jax.random.normal(jax.random.PRNGKey(1), (batch, num_outputs))
    _ = fixed_normal_log_prob(loc, logstd, scale, actions)
    _ = fixed_normal_entropy(logstd)
    _ = fixed_normal_mode(loc)

    print("KERNEL_OK")
</pallas_src>

<mosaic_0001>
module attributes {stable_mosaic.version = 11 : i64} {
  func.func @_diag_gaussian_kernel(%arg0: i32, %arg1: memref<8x32xf32, #tpu.memory_space<vmem>>, %arg2: memref<32x16xf32, #tpu.memory_space<vmem>>, %arg3: memref<1x16xf32, #tpu.memory_space<vmem>>, %arg4: memref<8x8xf32, #tpu.memory_space<vmem>>, %arg5: memref<8x8xf32, #tpu.memory_space<vmem>>, %arg6: memref<8x8xf32, #tpu.memory_space<vmem>>) attributes {dimension_semantics = [#tpu.dimension_semantics<parallel>], iteration_bounds = array<i64: 2>, scalar_prefetch = 0 : i64, scratch_operands = 0 : i64, tpu.core_type = #tpu.core_type<tc>, window_params = [{transform_indices = @transform_0, window_bounds = array<i64: 8, 32>}, {pipeline_mode = #tpu.pipeline_mode<synchronous>, transform_indices = @transform_1, window_bounds = array<i64: 32, 16>}, {pipeline_mode = #tpu.pipeline_mode<synchronous>, transform_indices = @transform_2, window_bounds = array<i64: 1, 16>}, {transform_indices = @transform_3, window_bounds = array<i64: 8, 8>}, {transform_indices = @transform_4, window_bounds = array<i64: 8, 8>}, {transform_indices = @transform_5, window_bounds = array<i64: 8, 8>}]} {
    %c0 = arith.constant 0 : index
    %c0_0 = arith.constant 0 : index
    %0 = vector.load %arg1[%c0, %c0_0] : memref<8x32xf32, #tpu.memory_space<vmem>>, vector<8x32xf32>
    %c0_1 = arith.constant 0 : index
    %c0_2 = arith.constant 0 : index
    %1 = vector.load %arg2[%c0_1, %c0_2] : memref<32x16xf32, #tpu.memory_space<vmem>>, vector<32x16xf32>
    %cst = arith.constant dense<0.000000e+00> : vector<8x16xf32>
    %2 = tpu.matmul %0, %1, %cst {dimension_numbers = #tpu.dot_dimension_numbers<[1], [0], [0], [1], [0, 0, 1, 1], [], []>} : vector<8x32xf32>, vector<32x16xf32>, vector<8x16xf32> -> vector<8x16xf32>
    %c0_3 = arith.constant 0 : index
    %c0_4 = arith.constant 0 : index
    %3 = vector.load %arg3[%c0_3, %c0_4] : memref<1x16xf32, #tpu.memory_space<vmem>>, vector<1x16xf32>
    %4 = vector.broadcast %3 : vector<1x16xf32> to vector<8x16xf32>
    %5 = arith.addf %2, %4 : vector<8x16xf32>
    %6 = vector.extract_strided_slice %5 {offsets = [0, 0], sizes = [8, 8], strides = [1, 1]} : vector<8x16xf32> to vector<8x8xf32>
    %7 = vector.extract_strided_slice %5 {offsets = [0, 8], sizes = [8, 8], strides = [1, 1]} : vector<8x16xf32> to vector<8x8xf32>
    %c0_5 = arith.constant 0 : index
    %c0_6 = arith.constant 0 : index
    %8 = vector.load %arg4[%c0_5, %c0_6] : memref<8x8xf32, #tpu.memory_space<vmem>>, vector<8x8xf32>
    tpu.vector_store %arg4[%c0_5, %c0_6], %6 {strides = array<i32>} : memref<8x8xf32, #tpu.memory_space<vmem>>, vector<8x8xf32>,
    %c0_7 = arith.constant 0 : index
    %c0_8 = arith.constant 0 : index
    %9 = vector.load %arg5[%c0_7, %c0_8] : memref<8x8xf32, #tpu.memory_space<vmem>>, vector<8x8xf32>
    tpu.vector_store %arg5[%c0_7, %c0_8], %7 {strides = array<i32>} : memref<8x8xf32, #tpu.memory_space<vmem>>, vector<8x8xf32>,
    %10 = math.exp %7 : vector<8x8xf32>
    %c0_9 = arith.constant 0 : index
    %c0_10 = arith.constant 0 : index
    %11 = vector.load %arg6[%c0_9, %c0_10] : memref<8x8xf32, #tpu.memory_space<vmem>>, vector<8x8xf32>
    tpu.vector_store %arg6[%c0_9, %c0_10], %10 {strides = array<i32>} : memref<8x8xf32, #tpu.memory_space<vmem>>, vector<8x8xf32>,
    return
  }
  func.func @transform_0(%arg0: i32) -> (i32, i32) {
    %c0_i32 = arith.constant 0 : i32
    %c0_i32_0 = arith.constant 0 : i32
    return %arg0, %c0_i32 : i32, i32
  }
  func.func @transform_1(%arg0: i32) -> (i32, i32) {
    %c0_i32 = arith.constant 0 : i32
    %c0_i32_0 = arith.constant 0 : i32
    %c0_i32_1 = arith.constant 0 : i32
    return %c0_i32, %c0_i32_0 : i32, i32
  }
  func.func @transform_2(%arg0: i32) -> (i32, i32) {
    %c0_i32 = arith.constant 0 : i32
    %c0_i32_0 = arith.constant 0 : i32
    %c0_i32_1 = arith.constant 0 : i32
    return %c0_i32, %c0_i32_0 : i32, i32
  }
  func.func @transform_3(%arg0: i32) -> (i32, i32) {
    %c0_i32 = arith.constant 0 : i32
    %c0_i32_0 = arith.constant 0 : i32
    return %arg0, %c0_i32 : i32, i32
  }
  func.func @transform_4(%arg0: i32) -> (i32, i32) {
    %c0_i32 = arith.constant 0 : i32
    %c0_i32_0 = arith.constant 0 : i32
    return %arg0, %c0_i32 : i32, i32
  }
  func.func @transform_5(%arg0: i32) -> (i32, i32) {
    %c0_i32 = arith.constant 0 : i32
    %c0_i32_0 = arith.constant 0 : i32
    return %arg0, %c0_i32 : i32, i32
  }
}

</mosaic_0001>

<llo_original>
// kernel: tpu_custom_call.1
$region0: #{tpu_custom_call.1}
  #allocation0 [shape = 'u32[]', space=smem, size = 0x4, offset = 0x4, fixed_abs, tag = 'smem constant byte address 0x4 - core index']
  #allocation1 [shape = 'u32[144,128]{1,0:T(1,128)}', space=vmem, size = 0x12000, scoped, tag = 'internal scratch']
  %s0 = inlined_call_operand.vmem [shape: f32[16,32], index: 0, kind: input, shape index: {}]
  %s1 = inlined_call_operand.vmem [shape: f32[32,16], index: 1, kind: input, shape index: {}]
  %s2 = inlined_call_operand.vmem [shape: f32[1,16], index: 2, kind: input, shape index: {}]
  %s3 = inlined_call_operand.vmem [shape: f32[16,8], index: 3, kind: output, shape index: {0}]
  %s4 = inlined_call_operand.vmem [shape: f32[16,8], index: 4, kind: output, shape index: {1}]
  %s5 = inlined_call_operand.vmem [shape: f32[16,8], index: 5, kind: output, shape index: {2}]
  %6 = xla_tuple %s3, %s4, %s5
  %s7 = sld [smem:[#allocation0]]
  $region61: #{tpu_custom_call.1} parent=0
    _
  %s9 = ssub.s32 1, %s7
  %s10 = scalar_select 0, %s9, %s7
  loop: start=0, step=1, limit=4
  $region2: #{tpu_custom_call.1} parent=0 // loop_pre_header
    _
  $region3: #{tpu_custom_call.1} parent=0 // loop_header
    %s12 = sphi 0, %s16
    %p13 = scmp.ge.s32.totalorder %s12, 4
    %s22 = sphi 0, %s24
    %s25 = sphi 0, %s22
    %s26 = sphi 0, %s25
    %s42 = sphi 0, %s26
    %s46 = sphi 0, %s46
    %s48 = sphi 0, %s46
    %s49 = sphi 0, %s48
    %s63 = sphi 0, %s49
    %s67 = sphi 0, %s67
    %s69 = sphi 0, %s67
    %s70 = sphi 0, %s69
    %s84 = sphi 0, %s70
    %s90 = sphi 0, %s92
    %s93 = sphi 0, %s90
    %s94 = sphi 0, %s93
    %s110 = sphi 0, %s94
    %s116 = sphi 0, %s118
    %s119 = sphi 0, %s116
    %s120 = sphi 0, %s119
    %s136 = sphi 0, %s120
    %s142 = sphi 0, %s144
    %s145 = sphi 0, %s142
    %s146 = sphi 0, %s145
    %s162 = sphi 0, %s146
  $region4: #{tpu_custom_call.1} parent=0 // loop_header_branch
    %15 = sbr.rel (%p13) target = $region8
  $region5: #{tpu_custom_call.1} parent=0 // loop_body
    %s17 = ssub.s32 %s12, 1
    %s18 = ssub.s32 %s12, 2
    %s19 = sadd.s32 %s12, 1
    %s20 = ssub.s32 %s12, %s19
    %p21 = scmp.eq.s32.totalorder %s20, 0
    %s23 = sadd.s32 %s22, 1
    %s24 = scalar_select %p21, %s22, %s23
    %p27 = pneg %p21
    %p28 = scmp.eq.s32.totalorder %s12, 1
    %p29 = por %p27, %p28
    %p30 = scmp.ne.s32.totalorder %s22, %s25
    %p31 = scmp.eq.s32.totalorder %s12, 0
    %p32 = por %p30, %p31
    %p33 = scmp.ne.s32.totalorder %s22, %s25
    %p34 = scmp.eq.s32.totalorder %s17, 1
    %p35 = por %p33, %p34
    %p36 = scmp.ne.s32.totalorder %s25, %s26
    %p37 = scmp.eq.s32.totalorder %s17, 0
    %p38 = por %p36, %p37
    %p39 = scmp.ne.s32.totalorder %s25, %s26
    %p40 = scmp.eq.s32.totalorder %s18, 1
    %p41 = por %p39, %p40
    %p43 = scmp.ne.s32.totalorder %s26, %s42
    %p44 = scmp.eq.s32.totalorder %s18, 0
    %p45 = por %p43, %p44
    %s47 = sadd.s32 %s46, 1
    %p50 = scmp.eq.s32.totalorder %s12, 1
    %p51 = scmp.ne.s32.totalorder %s46, %s48
    %p52 = scmp.eq.s32.totalorder %s12, 0
    %p53 = por %p51, %p52
    %p54 = scmp.ne.s32.totalorder %s46, %s48
    %p55 = scmp.eq.s32.totalorder %s17, 1
    %p56 = por %p54, %p55
    %p57 = scmp.ne.s32.totalorder %s48, %s49
    %p58 = scmp.eq.s32.totalorder %s17, 0
    %p59 = por %p57, %p58
    %p60 = scmp.ne.s32.totalorder %s48, %s49
    %p61 = scmp.eq.s32.totalorder %s18, 1
    %p62 = por %p60, %p61
    %p64 = scmp.ne.s32.totalorder %s49, %s63
    %p65 = scmp.eq.s32.totalorder %s18, 0
    %p66 = por %p64, %p65
    %s68 = sadd.s32 %s67, 1
    %p71 = scmp.eq.s32.totalorder %s12, 1
    %p72 = scmp.ne.s32.totalorder %s67, %s69
    %p73 = scmp.eq.s32.totalorder %s12, 0
    %p74 = por %p72, %p73
    %p75 = scmp.ne.s32.totalorder %s67, %s69
    %p76 = scmp.eq.s32.totalorder %s17, 1
    %p77 = por %p75, %p76
    %p78 = scmp.ne.s32.totalorder %s69, %s70
    %p79 = scmp.eq.s32.totalorder %s17, 0
    %p80 = por %p78, %p79
    %p81 = scmp.ne.s32.totalorder %s69, %s70
    %p82 = scmp.eq.s32.totalorder %s18, 1
    %p83 = por %p81, %p82
    %p85 = scmp.ne.s32.totalorder %s70, %s84
    %p86 = scmp.eq.s32.totalorder %s18, 0
    %p87 = por %p85, %p86
    %s88 = ssub.s32 %s12, %s19
    %p89 = scmp.eq.s32.totalorder %s88, 0
    %s91 = sadd.s32 %s90, 1
    %s92 = scalar_select %p89, %s90, %s91
    %p95 = pneg %p89
    %p96 = scmp.eq.s32.totalorder %s12, 1
    %p97 = por %p95, %p96
    %p98 = scmp.ne.s32.totalorder %s90, %s93
    %p99 = scmp.eq.s32.totalorder %s12, 0
    %p100 = por %p98, %p99
    %p101 = scmp.ne.s32.totalorder %s90, %s93
    %p102 = scmp.eq.s32.totalorder %s17, 1
    %p103 = por %p101, %p102
    %p104 = scmp.ne.s32.totalorder %s93, %s94
    %p105 = scmp.eq.s32.totalorder %s17, 0
    %p106 = por %p104, %p105
    %p107 = scmp.ne.s32.totalorder %s93, %s94
    %p108 = scmp.eq.s32.totalorder %s18, 1
    %p109 = por %p107, %p108
    %p111 = scmp.ne.s32.totalorder %s94, %s110
    %p112 = scmp.eq.s32.totalorder %s18, 0
    %p113 = por %p111, %p112
    %s114 = ssub.s32 %s12, %s19
    %p115 = scmp.eq.s32.totalorder %s114, 0
    %s117 = sadd.s32 %s116, 1
    %s118 = scalar_select %p115, %s116, %s117
    %p121 = pneg %p115
    %p122 = scmp.eq.s32.totalorder %s12, 1
    %p123 = por %p121, %p122
    %p124 = scmp.ne.s32.totalorder %s116, %s119
    %p125 = scmp.eq.s32.totalorder %s12, 0
    %p126 = por %p124, %p125
    %p127 = scmp.ne.s32.totalorder %s116, %s119
    %p128 = scmp.eq.s32.totalorder %s17, 1
    %p129 = por %p127, %p128
    %p130 = scmp.ne.s32.totalorder %s119, %s120
    %p131 = scmp.eq.s32.totalorder %s17, 0
    %p132 = por %p130, %p131
    %p133 = scmp.ne.s32.totalorder %s119, %s120
    %p134 = scmp.eq.s32.totalorder %s18, 1
    %p135 = por %p133, %p134
    %p137 = scmp.ne.s32.totalorder %s120, %s136
    %p138 = scmp.eq.s32.totalorder %s18, 0
    %p139 = por %p137, %p138
    %s140 = ssub.s32 %s12, %s19
    %p141 = scmp.eq.s32.totalorder %s140, 0
    %s143 = sadd.s32 %s142, 1
    %s144 = scalar_select %p141, %s142, %s143
    %p147 = pneg %p141
    %p148 = scmp.eq.s32.totalorder %s12, 1
    %p149 = por %p147, %p148
    %p150 = scmp.ne.s32.totalorder %s142, %s145
    %p151 = scmp.eq.s32.totalorder %s12, 0
    %p152 = por %p150, %p151
    %p153 = scmp.ne.s32.totalorder %s142, %s145
    %p154 = scmp.eq.s32.totalorder %s17, 1
    %p155 = por %p153, %p154
    %p156 = scmp.ne.s32.totalorder %s145, %s146
    %p157 = scmp.eq.s32.totalorder %s17, 0
    %p158 = por %p156, %p157
    %p159 = scmp.ne.s32.totalorder %s145, %s146
    %p160 = scmp.eq.s32.totalorder %s18, 1
    %p161 = por %p159, %p160
    %p163 = scmp.ne.s32.totalorder %s146, %s162
    %p164 = scmp.eq.s32.totalorder %s18, 0
    %p165 = por %p163, %p164
    %p166 = scmp.le.s32.totalorder 1, %s12
    %p167 = scmp.lt.s32.totalorder %s12, 3
    %p168 = pnand %p166, %p167
    %p169 = pneg %p168
    // Predicated region
    $region9: #{tpu_custom_call.1} parent=5 // pred_check
      _
    $region10: #{tpu_custom_call.1} parent=5 // pred_check_branch
      %171 = sbr.rel (%p168) target = $region12
    $region11: #{tpu_custom_call.1} parent=5 // pred_region
      %s172 = ssub.s32 %s12, 1
      // Predicated region
      $region13: #{tpu_custom_call.1} parent=11 // pred_check
        %p173 = pneg %p59
      $region14: #{tpu_custom_call.1} parent=11 // pred_check_branch
        %175 = sbr.rel (%p173) target = $region16
      $region15: #{tpu_custom_call.1} parent=11 // pred_region
        _
      $region16: #{tpu_custom_call.1} parent=11 // pred_fallthru
        _
      // Predicated region
      $region17: #{tpu_custom_call.1} parent=11 // pred_check
        %p176 = pneg %p80
      $region18: #{tpu_custom_call.1} parent=11 // pred_check_branch
        %178 = sbr.rel (%p176) target = $region20
      $region19: #{tpu_custom_call.1} parent=11 // pred_region
        _
      $region20: #{tpu_custom_call.1} parent=11 // pred_fallthru
        _
    $region12: #{tpu_custom_call.1} parent=5 // pred_fallthru
      _
    %p179 = scmp.lt.s32.totalorder %s12, 2
    // Predicated region
    $region21: #{tpu_custom_call.1} parent=5 // pred_check
      %p180 = pneg %p179
    $region22: #{tpu_custom_call.1} parent=5 // pred_check_branch
      %182 = sbr.rel (%p180) target = $region24
    $region23: #{tpu_custom_call.1} parent=5 // pred_region
      // Predicated region
      $region25: #{tpu_custom_call.1} parent=23 // pred_check
        %p183 = pneg %p32
      $region26: #{tpu_custom_call.1} parent=23 // pred_check_branch
        %185 = sbr.rel (%p183) target = $region28
      $region27: #{tpu_custom_call.1} parent=23 // pred_region
        %p186 = scmp.lt.s32.totalorder %s12, 1
        %s187 = scalar_select %p186, %s12, 1
        %s188 = smul.addr %s187, 8
        %s189 = scalar_lea.vmem %s0, %s188
      $region28: #{tpu_custom_call.1} parent=23 // pred_fallthru
        _
    $region24: #{tpu_custom_call.1} parent=5 // pred_fallthru
      _
    %p190 = scmp.le.s32.totalorder 1, %s12
    %p191 = scmp.lt.s32.totalorder %s12, 3
    %p192 = pnand %p190, %p191
    %p193 = pneg %p192
    // Predicated region
    $region29: #{tpu_custom_call.1} parent=5 // pred_check
      _
    $region30: #{tpu_custom_call.1} parent=5 // pred_check_branch
      %195 = sbr.rel (%p192) target = $region32
    $region31: #{tpu_custom_call.1} parent=5 // pred_region
      %s196 = ssub.s32 %s12, 1
      %p197 = scmp.lt.s32.totalorder %s17, 1
      %s198 = scalar_select %p197, %s17, 1
      %s199 = smul.addr %s198, 8
      %s200 = scalar_lea.vmem %s0, %s199
      %p201 = pneg %p38
      %p202 = pneg %p35
      %p203 = pneg %p59
      %p204 = pneg %p56
      %p205 = pneg %p80
      %p206 = pneg %p77
      %p207 = pneg %p106
      %p208 = pneg %p103
      %p209 = scmp.lt.s32.totalorder %s17, 1
      %s210 = scalar_select %p209, %s17, 1
      %s211 = smul.addr %s210, 8
      %s212 = scalar_lea.vmem %s3, %s211
      %p213 = pneg %p132
      %p214 = pneg %p129
      %p215 = scmp.lt.s32.totalorder %s17, 1
      %s216 = scalar_select %p215, %s17, 1
      %s217 = smul.addr %s216, 8
      %s218 = scalar_lea.vmem %s4, %s217
      %p219 = pneg %p158
      %p220 = pneg %p155
      %p221 = scmp.lt.s32.totalorder %s17, 1
      %s222 = scalar_select %p221, %s17, 1
      %s223 = smul.addr %s222, 8
      %s224 = scalar_lea.vmem %s5, %s223
      %p225 = scmp.lt.s32.totalorder %s17, 1
      %s226 = scalar_select %p225, %s17, 1
      %s227 = smul.addr %s226, 8
      %s228 = scalar_lea.vmem %s0, %s227
      %p229 = scmp.lt.s32.totalorder %s17, 1
      %s230 = scalar_select %p229, %s17, 1
      %s231 = smul.addr %s230, 8
      %s232 = scalar_lea.vmem %s3, %s231
      %p233 = scmp.lt.s32.totalorder %s17, 1
      %s234 = scalar_select %p233, %s17, 1
      %s235 = smul.addr %s234, 8
      %s236 = scalar_lea.vmem %s4, %s235
      %p237 = scmp.lt.s32.totalorder %s17, 1
      %s238 = scalar_select %p237, %s17, 1
      %s239 = smul.addr %s238, 8
      %s240 = scalar_lea.vmem %s5, %s239
      %v241 = vld [vmem:[%s228] sm:$0xff]
      %v242 = vld [vmem:[%s1] sm:$0xff]
      %v243 = vld [vmem:[%s1 + $0x8] sm:$0xff]
      %v244 = vld [vmem:[%s1 + $0x10] sm:$0xff]
      %v245 = vld [vmem:[%s1 + $0x18] sm:$0xff]
      %v246 = vld [vmem:[%s2] sm:$0x1]
      %v248 = vlaneseq
      %v249 = vshrl.u32 %v248, 7
      %v250 = vsub.s32 0, %v249
      %v251 = vrot.slane %v246, %v250
      %vm253 = vcmask 261120
      %v255 = vsel %vm253, %v241, 0
      %257 = vmatprep.subr.mxu0 0.0
      %258 = vmatpush1.msra.mxu0 0.0
      %259 = vmatprep.subr.mxu0 0.0
      %260 = vmatpush1.msra.mxu0 0.0
      %261 = vmatprep.subr.mxu0 0.0
      %262 = vmatpush1.msra.mxu0 0.0
      %263 = vmatprep.subr.mxu0 0.0
      %264 = vmatpush1.msra.mxu0 0.0
      %265 = vmatprep.subr.mxu0 0.0
      %266 = vmatpush1.msra.mxu0 0.0
      %267 = vmatprep.subr.mxu0 0.0
      %268 = vmatpush1.msra.mxu0 0.0
      %269 = vmatprep.subr.mxu0 0.0
      %270 = vmatpush1.msra.mxu0 0.0
      %271 = vmatprep.subr.mxu0 0.0
      %272 = vmatpush1.msra.mxu0 0.0
      %273 = vmatprep.subr.mxu0 0.0
      %274 = vmatpush1.msra.mxu0 0.0
      %275 = vmatprep.subr.mxu0 0.0
      %276 = vmatpush1.msra.mxu0 0.0
      %277 = vmatprep.subr.mxu0 0.0
      %278 = vmatpush1.msra.mxu0 0.0
      %279 = vmatprep.subr.mxu0 0.0
      %280 = vmatpush1.msra.mxu0 0.0
      %281 = vmatprep.subr.mxu0 0.0
      %282 = vmatpush1.msra.mxu0 %v245
      %283 = vmatprep.subr.mxu0 0.0
      %284 = vmatpush1.msra.mxu0 %v244
      %285 = vmatprep.subr.mxu0 0.0
      %286 = vmatpush1.msra.mxu0 %v243
      %287 = vmatprep.subr.mxu0 0.0
      %288 = vmatpush1.msra.mxu0 %v242
      %289 = vmatprep.subr.mxu0 0.0
      %290 = vmatpush2.msra.mxu0 0.0
      %291 = vmatprep.subr.mxu0 0.0
      %292 = vmatpush2.msra.mxu0 0.0
      %293 = vmatprep.subr.mxu0 0.0
      %294 = vmatpush2.msra.mxu0 0.0
      %295 = vmatprep.subr.mxu0 0.0
      %296 = vmatpush2.msra.mxu0 0.0
      %297 = vmatprep.subr.mxu0 0.0
      %298 = vmatpush2.msra.mxu0 0.0
      %299 = vmatprep.subr.mxu0 0.0
      %300 = vmatpush2.msra.mxu0 0.0
      %301 = vmatprep.subr.mxu0 0.0
      %302 = vmatpush2.msra.mxu0 0.0
      %303 = vmatprep.subr.mxu0 0.0
      %304 = vmatpush2.msra.mxu0 0.0
      %305 = vmatprep.subr.mxu0 0.0
      %306 = vmatpush2.msra.mxu0 0.0
      %307 = vmatprep.subr.mxu0 0.0
      %308 = vmatpush2.msra.mxu0 0.0
      %309 = vmatprep.subr.mxu0 0.0
      %310 = vmatpush2.msra.mxu0 0.0
      %311 = vmatprep.subr.mxu0 0.0
      %312 = vmatpush2.msra.mxu0 0.0
      %313 = vmatprep.subr.mxu0 0.0
      %314 = vmatpush2.msra.mxu0 0.0
      %315 = vmatprep.subr.mxu0 0.0
      %316 = vmatpush2.msra.mxu0 0.0
      %317 = vmatprep.subr.mxu0 0.0
      %318 = vmatpush2.msra.mxu0 0.0
      %319 = vmatprep.subr.mxu0 0.0
      %320 = vmatpush2.msra.mxu0 0.0
      %321 = vmatprep.mubr.f32.mxu0 0.0
      %322 = vmatmul.mubr.f32.gmra.mxu0 %v255
      %v323 = vpop.f32.mrf.mxu0
      %v324 = vadd.f32 %v251, %v323
      %v325 = vpop.f32.mrf.mxu0
      %326 = vdwg.mxu0
      %vm327 = vcmask 64512
      %328 = vst.msk [vmem:[%s232] sm:$0xff] %vm327, %v324
      %330 = vrot.lane.b32.xlu0 %v324, 120
      %v331 = vpop.permute.xlu0 %330
      %333 = vst.msk [vmem:[%s236] sm:$0xff] %vm327, %v331
      %v334 = vmul.f32 %v324, 1.442695
      %v335 = vpow.pop %v334
      %337 = vrot.lane.b32.xlu0 %v335, 120
      %v338 = vpop.permute.xlu0 %337
      %340 = vst.msk [vmem:[%s240] sm:$0xff] %vm327, %v338
      %p341 = scmp.lt.s32.totalorder %s17, 1
      %s342 = scalar_select %p341, %s17, 1
      %s343 = smul.addr %s342, 8
      %s344 = scalar_lea.vmem %s3, %s343
      %p345 = scmp.lt.s32.totalorder %s17, 1
      %s346 = scalar_select %p345, %s17, 1
      %s347 = smul.addr %s346, 8
      %s348 = scalar_lea.vmem %s4, %s347
      %p349 = scmp.lt.s32.totalorder %s17, 1
      %s350 = scalar_select %p349, %s17, 1
      %s351 = smul.addr %s350, 8
      %s352 = scalar_lea.vmem %s5, %s351
      // Predicated region
      $region33: #{tpu_custom_call.1} parent=31 // pred_check
        %p353 = pneg %p103
      $region34: #{tpu_custom_call.1} parent=31 // pred_check_branch
        %355 = sbr.rel (%p353) target = $region36
      $region35: #{tpu_custom_call.1} parent=31 // pred_region
        _
      $region36: #{tpu_custom_call.1} parent=31 // pred_fallthru
        _
      // Predicated region
      $region37: #{tpu_custom_call.1} parent=31 // pred_check
        %p356 = pneg %p129
      $region38: #{tpu_custom_call.1} parent=31 // pred_check_branch
        %358 = sbr.rel (%p356) target = $region40
      $region39: #{tpu_custom_call.1} parent=31 // pred_region
        _
      $region40: #{tpu_custom_call.1} parent=31 // pred_fallthru
        _
      // Predicated region
      $region41: #{tpu_custom_call.1} parent=31 // pred_check
        %p359 = pneg %p155
      $region42: #{tpu_custom_call.1} parent=31 // pred_check_branch
        %361 = sbr.rel (%p359) target = $region44
      $region43: #{tpu_custom_call.1} parent=31 // pred_region
        _
      $region44: #{tpu_custom_call.1} parent=31 // pred_fallthru
        _
    $region32: #{tpu_custom_call.1} parent=5 // pred_fallthru
      _
    %p362 = scmp.le.s32.totalorder 2, %s12
    // Predicated region
    $region45: #{tpu_custom_call.1} parent=5 // pred_check
      %p363 = pneg %p362
    $region46: #{tpu_custom_call.1} parent=5 // pred_check_branch
      %365 = sbr.rel (%p363) target = $region48
    $region47: #{tpu_custom_call.1} parent=5 // pred_region
      %s366 = ssub.s32 %s12, 2
      // Predicated region
      $region49: #{tpu_custom_call.1} parent=47 // pred_check
        %p367 = pneg %p109
      $region50: #{tpu_custom_call.1} parent=47 // pred_check_branch
        %369 = sbr.rel (%p367) target = $region52
      $region51: #{tpu_custom_call.1} parent=47 // pred_region
        %p370 = scmp.lt.s32.totalorder %s18, 1
        %s371 = scalar_select %p370, %s18, 1
        %s372 = smul.addr %s371, 8
        %s373 = scalar_lea.vmem %s3, %s372
      $region52: #{tpu_custom_call.1} parent=47 // pred_fallthru
        _
      // Predicated region
      $region53: #{tpu_custom_call.1} parent=47 // pred_check
        %p374 = pneg %p135
      $region54: #{tpu_custom_call.1} parent=47 // pred_check_branch
        %376 = sbr.rel (%p374) target = $region56
      $region55: #{tpu_custom_call.1} parent=47 // pred_region
        %p377 = scmp.lt.s32.totalorder %s18, 1
        %s378 = scalar_select %p377, %s18, 1
        %s379 = smul.addr %s378, 8
        %s380 = scalar_lea.vmem %s4, %s379
      $region56: #{tpu_custom_call.1} parent=47 // pred_fallthru
        _
      // Predicated region
      $region57: #{tpu_custom_call.1} parent=47 // pred_check
        %p381 = pneg %p161
      $region58: #{tpu_custom_call.1} parent=47 // pred_check_branch
        %383 = sbr.rel (%p381) target = $region60
      $region59: #{tpu_custom_call.1} parent=47 // pred_region
        %p384 = scmp.lt.s32.totalorder %s18, 1
        %s385 = scalar_select %p384, %s18, 1
        %s386 = smul.addr %s385, 8
        %s387 = scalar_lea.vmem %s5, %s386
      $region60: #{tpu_custom_call.1} parent=47 // pred_fallthru
        _
    $region48: #{tpu_custom_call.1} parent=5 // pred_fallthru
      _
  $region6: #{tpu_custom_call.1} parent=0 // loop_footer
    %s16 = sadd.s32 1, %s12
  $region7: #{tpu_custom_call.1} parent=0 // loop_footer_branch
    %11 = sbr.rel target = $region3
  $region8: #{tpu_custom_call.1} parent=0 // loop_exit
    _

</llo_original>
